<compile_context>
chip_gen: v7x
topology: tpu7x:2x2x1
jax: 0.10.0
libtpu: 0.0.40
codegen_flags: <defaults>
</compile_context>

<pallas_src>
import functools

import jax
import jax.numpy as jnp
from jax.experimental import pallas as pl
from jax.experimental.pallas import tpu as pltpu

HIDDEN = 256
HEAD_PAD = 128  # lane-dense fused-head width (>= nact + 1, multiple of 128)


def _round_up(n, m):
    return ((n + m - 1) // m) * m


def _policy_kernel(x_ref, w_aff_ref, b_aff_ref, w_head_ref, b_head_ref,
                   prob_ref, val_ref, *, nact):
    # In-kernel bf16 cast of x (hidden under the x DMA; no extra XLA pass).
    x_bf = x_ref[...].astype(jnp.bfloat16)

    # ---- Affine + ReLU (bf16 MXU matmul, f32 accumulation) -----------------
    h = jnp.dot(x_bf, w_aff_ref[...], preferred_element_type=jnp.float32)
    h = jnp.maximum(h + b_aff_ref[...], 0.0)                 # (TB, 256) f32

    # ---- Fused heads: single MXU pass over lane-padded (256, 128) RHS ------
    logits = jnp.dot(h.astype(w_head_ref.dtype), w_head_ref[...],
                     preferred_element_type=jnp.float32)
    logits = logits + b_head_ref[...]                        # (TB, 128) f32

    lane = jax.lax.broadcasted_iota(jnp.int32, logits.shape, 1)
    is_act = lane < nact           # action-logit lanes
    is_val = lane == nact          # value lane

    # Numerically-stable softmax restricted to the real action lanes.
    masked = jnp.where(is_act, logits, -1e30)
    m = jnp.max(masked, axis=-1, keepdims=True)
    e = jnp.exp(masked - m)                                  # padded lanes -> 0
    denom = jnp.sum(e, axis=-1, keepdims=True)
    r = pl.reciprocal(denom, approx=True)                    # EUP vrcp
    r = r * (2.0 - denom * r)                                # one Newton step
    prob = e * r                                             # (TB, 128)

    # Two narrow f32 outputs: no wide slab to write and re-read in the wrapper.
    prob_ref[...] = prob[:, :nact]
    val_ref[...] = jnp.sum(jnp.where(is_val, logits, 0.0),
                           axis=-1, keepdims=True)


def pack_policy_params(params):
    """One-time head fusion + bf16 weight casts (hoisted out of the forward)."""
    w_aff, b_aff, w_act, b_act, w_val, b_val = params
    hidden = w_aff.shape[1]
    nact = w_act.shape[1]
    assert nact + 1 <= HEAD_PAD

    # Fused, lane-padded head weights/biases: [W_act | W_val | 0 ...].
    w_heads = jnp.zeros((hidden, HEAD_PAD), jnp.float32)
    w_heads = w_heads.at[:, :nact].set(w_act).at[:, nact:nact + 1].set(w_val)
    b_heads = jnp.zeros((1, HEAD_PAD), jnp.float32)
    b_heads = b_heads.at[:, :nact].set(b_act).at[:, nact:nact + 1].set(b_val)

    return (w_aff.astype(jnp.bfloat16), b_aff.astype(jnp.float32),
            w_heads.astype(jnp.bfloat16), b_heads)


def _choose_tb(batch, tb):
    TB = max(8, _round_up(min(int(tb), _round_up(batch, 8)), 8))
    # v7x megacore: ensure >= 2 grid steps whenever the batch can be split so
    # dimension_semantics=("parallel",) shards across both TensorCores.
    if batch > 8 and pl.cdiv(batch, TB) < 2:
        TB = max(8, _round_up(pl.cdiv(batch, 2), 8))
    return TB


@functools.partial(jax.jit, static_argnames=("nact", "tb"))
def policy_forward(x, w_aff_bf, b_aff, w_heads_bf, b_heads, *, nact, tb=2048):
    """x: (B, nact*num_state_elem) f32.

    Returns (action_prob (B, nact) f32, state_value (B, 1) f32).
    """
    B, d_in = x.shape
    hidden = w_aff_bf.shape[1]

    TB = _choose_tb(B, tb)
    grid = (pl.cdiv(B, TB),)   # ragged last block handled by Pallas; no jnp.pad

    kernel = functools.partial(_policy_kernel, nact=nact)

    prob, val = pl.pallas_call(
        kernel,
        out_shape=(jax.ShapeDtypeStruct((B, nact), jnp.float32),
                   jax.ShapeDtypeStruct((B, 1), jnp.float32)),
        grid=grid,
        in_specs=[
            pl.BlockSpec((TB, d_in), lambda i: (i, 0)),          # x: streamed f32
            pl.BlockSpec((d_in, hidden), lambda i: (0, 0)),      # resident
            pl.BlockSpec((1, hidden), lambda i: (0, 0)),         # resident
            pl.BlockSpec((hidden, HEAD_PAD), lambda i: (0, 0)),  # resident
            pl.BlockSpec((1, HEAD_PAD), lambda i: (0, 0)),       # resident
        ],
        out_specs=[
            pl.BlockSpec((TB, nact), lambda i: (i, 0)),
            pl.BlockSpec((TB, 1), lambda i: (i, 0)),
        ],
        compiler_params=pltpu.CompilerParams(
            dimension_semantics=("parallel",),
            vmem_limit_bytes=32 * 1024 * 1024),
        cost_estimate=pl.CostEstimate(
            flops=2 * B * (d_in * hidden + hidden * HEAD_PAD),
            transcendentals=B * (HEAD_PAD + 1),
            bytes_accessed=(x.size * 4
                            + w_aff_bf.size * 2 + b_aff.size * 4
                            + w_heads_bf.size * 2 + b_heads.size * 4
                            + B * (nact + 1) * 4),
        ),
    )(x, w_aff_bf, b_aff, w_heads_bf, b_heads)
    return prob, val


def init_policy_params(key, nact, num_state_elem, hidden=HIDDEN):
    """Deterministic synthetic init mirroring the PyTorch module's shapes."""
    d_in = nact * num_state_elem
    k = jax.random.split(key, 6)

    def uniform(kk, shape, fan_in):
        bound = 1.0 / jnp.sqrt(fan_in)
        return jax.random.uniform(kk, shape, jnp.float32, -bound, bound)

    w_aff = uniform(k[0], (d_in, hidden), d_in)
    b_aff = uniform(k[1], (1, hidden), d_in)
    w_act = uniform(k[2], (hidden, nact), hidden)
    b_act = uniform(k[3], (1, nact), hidden)
    w_val = uniform(k[4], (hidden, 1), hidden)
    b_val = uniform(k[5], (1, 1), hidden)
    return (w_aff, b_aff, w_act, b_act, w_val, b_val)


def _reference(x, params):
    w_aff, b_aff, w_act, b_act, w_val, b_val = params
    h = jnp.maximum(x @ w_aff + b_aff, 0.0)
    prob = jax.nn.softmax(h @ w_act + b_act, axis=-1)
    val = h @ w_val + b_val
    return prob, val


if __name__ == "__main__":
    nact = 8
    num_state_elem = 4
    batch = 2

    key = jax.random.PRNGKey(0)
    k_params, k_x, k_x2 = jax.random.split(key, 3)
    params = init_policy_params(k_params, nact, num_state_elem)
    packed = jax.block_until_ready(pack_policy_params(params))  # one-time pack

    # --- small batch (single-env RL inference style) -------------------------
    x = jax.random.normal(k_x, (batch, nact * num_state_elem), jnp.float32)
    action_prob, state_values = policy_forward(x, *packed, nact=nact)
    jax.block_until_ready((action_prob, state_values))

    prob_ref, val_ref = _reference(x, params)
    assert action_prob.shape == (batch, nact)
    assert state_values.shape == (batch, 1)
    # bf16 MXU operands -> compare against f32 reference with loose atol.
    assert jnp.allclose(action_prob, prob_ref, atol=1e-2)
    assert jnp.allclose(state_values, val_ref, atol=1e-2)
    assert jnp.allclose(jnp.sum(action_prob, axis=-1), 1.0, atol=1e-4)

    # --- larger, non-multiple-of-8 batch: ragged last block + grid >= 2 ------
    B2 = 130
    x2 = jax.random.normal(k_x2, (B2, nact * num_state_elem), jnp.float32)
    p2, v2 = policy_forward(x2, *packed, nact=nact, tb=64)   # grid=(3,), ragged
    jax.block_until_ready((p2, v2))
    p2_ref, v2_ref = _reference(x2, params)
    assert p2.shape == (B2, nact) and v2.shape == (B2, 1)
    assert jnp.allclose(p2, p2_ref, atol=1e-2)
    assert jnp.allclose(v2, v2_ref, atol=1e-2)
    assert jnp.allclose(jnp.sum(p2, axis=-1), 1.0, atol=1e-4)

    print("KERNEL_OK")
</pallas_src>

<mosaic_0001>
module attributes {stable_mosaic.version = 11 : i64} {
  func.func @_policy_kernel(%arg0: i32, %arg1: memref<8x32xf32, #tpu.memory_space<vmem>>, %arg2: memref<32x256xbf16, #tpu.memory_space<vmem>>, %arg3: memref<1x256xf32, #tpu.memory_space<vmem>>, %arg4: memref<256x128xbf16, #tpu.memory_space<vmem>>, %arg5: memref<1x128xf32, #tpu.memory_space<vmem>>, %arg6: memref<8x8xf32, #tpu.memory_space<vmem>>, %arg7: memref<8x1xf32, #tpu.memory_space<vmem>>) attributes {dimension_semantics = [#tpu.dimension_semantics<parallel>], iteration_bounds = array<i64: 1>, scalar_prefetch = 0 : i64, scratch_operands = 0 : i64, tpu.core_type = #tpu.core_type<tc>, window_params = [{transform_indices = @transform_0, window_bounds = array<i64: 8, 32>}, {pipeline_mode = #tpu.pipeline_mode<synchronous>, transform_indices = @transform_1, window_bounds = array<i64: 32, 256>}, {pipeline_mode = #tpu.pipeline_mode<synchronous>, transform_indices = @transform_2, window_bounds = array<i64: 1, 256>}, {pipeline_mode = #tpu.pipeline_mode<synchronous>, transform_indices = @transform_3, window_bounds = array<i64: 256, 128>}, {pipeline_mode = #tpu.pipeline_mode<synchronous>, transform_indices = @transform_4, window_bounds = array<i64: 1, 128>}, {transform_indices = @transform_5, window_bounds = array<i64: 8, 8>}, {transform_indices = @transform_6, window_bounds = array<i64: 8, 1>}]} {
    %c0 = arith.constant 0 : index
    %c0_0 = arith.constant 0 : index
    %0 = vector.load %arg1[%c0, %c0_0] : memref<8x32xf32, #tpu.memory_space<vmem>>, vector<8x32xf32>
    %1 = arith.truncf %0 : vector<8x32xf32> to vector<8x32xbf16>
    %c0_1 = arith.constant 0 : index
    %c0_2 = arith.constant 0 : index
    %2 = vector.load %arg2[%c0_1, %c0_2] : memref<32x256xbf16, #tpu.memory_space<vmem>>, vector<32x256xbf16>
    %cst = arith.constant dense<0.000000e+00> : vector<8x256xf32>
    %3 = tpu.matmul %1, %2, %cst {dimension_numbers = #tpu.dot_dimension_numbers<[1], [0], [0], [1], [0, 0, 1, 1], [], []>} : vector<8x32xbf16>, vector<32x256xbf16>, vector<8x256xf32> -> vector<8x256xf32>
    %c0_3 = arith.constant 0 : index
    %c0_4 = arith.constant 0 : index
    %4 = vector.load %arg3[%c0_3, %c0_4] : memref<1x256xf32, #tpu.memory_space<vmem>>, vector<1x256xf32>
    %5 = vector.broadcast %4 : vector<1x256xf32> to vector<8x256xf32>
    %6 = arith.addf %3, %5 : vector<8x256xf32>
    %cst_5 = arith.constant 0.000000e+00 : f32
    %7 = vector.broadcast %cst_5 : f32 to vector<8x256xf32>
    %8 = arith.maximumf %6, %7 : vector<8x256xf32>
    %9 = arith.truncf %8 : vector<8x256xf32> to vector<8x256xbf16>
    %c0_6 = arith.constant 0 : index
    %c0_7 = arith.constant 0 : index
    %10 = vector.load %arg4[%c0_6, %c0_7] : memref<256x128xbf16, #tpu.memory_space<vmem>>, vector<256x128xbf16>
    %cst_8 = arith.constant dense<0.000000e+00> : vector<8x128xf32>
    %11 = tpu.matmul %9, %10, %cst_8 {dimension_numbers = #tpu.dot_dimension_numbers<[1], [0], [0], [1], [0, 0, 1, 1], [], []>} : vector<8x256xbf16>, vector<256x128xbf16>, vector<8x128xf32> -> vector<8x128xf32>
    %c0_9 = arith.constant 0 : index
    %c0_10 = arith.constant 0 : index
    %12 = vector.load %arg5[%c0_9, %c0_10] : memref<1x128xf32, #tpu.memory_space<vmem>>, vector<1x128xf32>
    %13 = vector.broadcast %12 : vector<1x128xf32> to vector<8x128xf32>
    %14 = arith.addf %11, %13 : vector<8x128xf32>
    %15 = tpu.iota {dimensions = array<i32: 1>} : vector<8x128xi32>
    %c8_i32 = arith.constant 8 : i32
    %16 = vector.broadcast %c8_i32 : i32 to vector<8x128xi32>
    %17 = arith.cmpi slt, %15, %16 : vector<8x128xi32>
    %c8_i32_11 = arith.constant 8 : i32
    %18 = vector.broadcast %c8_i32_11 : i32 to vector<8x128xi32>
    %19 = arith.cmpi eq, %15, %18 : vector<8x128xi32>
    %cst_12 = arith.constant -1.000000e+30 : f32
    %20 = vector.broadcast %cst_12 : f32 to vector<8x128xf32>
    %21 = arith.select %17, %14, %20 : vector<8x128xi1>, vector<8x128xf32>
    %cst_13 = arith.constant dense<0xFF800000> : vector<8xf32>
    %22 = vector.multi_reduction <maximumf>, %21, %cst_13 [1] : vector<8x128xf32> to vector<8xf32>
    %23 = vector.shape_cast %22 : vector<8xf32> to vector<8x1xf32>
    %24 = vector.broadcast %23 : vector<8x1xf32> to vector<8x128xf32>
    %25 = arith.subf %21, %24 : vector<8x128xf32>
    %26 = math.exp %25 : vector<8x128xf32>
    %cst_14 = arith.constant dense<0.000000e+00> : vector<8xf32>
    %27 = vector.multi_reduction <add>, %26, %cst_14 [1] : vector<8x128xf32> to vector<8xf32>
    %28 = vector.shape_cast %27 : vector<8xf32> to vector<8x1xf32>
    %29 = tpu.reciprocal %28 {approx = true} : vector<8x1xf32> -> vector<8x1xf32>
    %30 = arith.mulf %28, %29 : vector<8x1xf32>
    %cst_15 = arith.constant 2.000000e+00 : f32
    %31 = vector.broadcast %cst_15 : f32 to vector<8x1xf32>
    %32 = arith.subf %31, %30 : vector<8x1xf32>
    %33 = arith.mulf %29, %32 : vector<8x1xf32>
    %34 = vector.broadcast %33 : vector<8x1xf32> to vector<8x128xf32>
    %35 = arith.mulf %26, %34 : vector<8x128xf32>
    %36 = vector.extract_strided_slice %35 {offsets = [0, 0], sizes = [8, 8], strides = [1, 1]} : vector<8x128xf32> to vector<8x8xf32>
    %c0_16 = arith.constant 0 : index
    %c0_17 = arith.constant 0 : index
    %37 = vector.load %arg6[%c0_16, %c0_17] : memref<8x8xf32, #tpu.memory_space<vmem>>, vector<8x8xf32>
    tpu.vector_store %arg6[%c0_16, %c0_17], %36 {strides = array<i32>} : memref<8x8xf32, #tpu.memory_space<vmem>>, vector<8x8xf32>,
    %cst_18 = arith.constant 0.000000e+00 : f32
    %38 = vector.broadcast %cst_18 : f32 to vector<8x128xf32>
    %39 = arith.select %19, %14, %38 : vector<8x128xi1>, vector<8x128xf32>
    %cst_19 = arith.constant dense<0.000000e+00> : vector<8xf32>
    %40 = vector.multi_reduction <add>, %39, %cst_19 [1] : vector<8x128xf32> to vector<8xf32>
    %41 = vector.shape_cast %40 : vector<8xf32> to vector<8x1xf32>
    %c0_20 = arith.constant 0 : index
    %c0_21 = arith.constant 0 : index
    %42 = vector.load %arg7[%c0_20, %c0_21] : memref<8x1xf32, #tpu.memory_space<vmem>>, vector<8x1xf32>
    tpu.vector_store %arg7[%c0_20, %c0_21], %41 {strides = array<i32>} : memref<8x1xf32, #tpu.memory_space<vmem>>, vector<8x1xf32>,
    return
  }
  func.func @transform_0(%arg0: i32) -> (i32, i32) {
    %c0_i32 = arith.constant 0 : i32
    %c0_i32_0 = arith.constant 0 : i32
    return %arg0, %c0_i32 : i32, i32
  }
  func.func @transform_1(%arg0: i32) -> (i32, i32) {
    %c0_i32 = arith.constant 0 : i32
    %c0_i32_0 = arith.constant 0 : i32
    %c0_i32_1 = arith.constant 0 : i32
    return %c0_i32, %c0_i32_0 : i32, i32
  }
  func.func @transform_2(%arg0: i32) -> (i32, i32) {
    %c0_i32 = arith.constant 0 : i32
    %c0_i32_0 = arith.constant 0 : i32
    %c0_i32_1 = arith.constant 0 : i32
    return %c0_i32, %c0_i32_0 : i32, i32
  }
  func.func @transform_3(%arg0: i32) -> (i32, i32) {
    %c0_i32 = arith.constant 0 : i32
    %c0_i32_0 = arith.constant 0 : i32
    %c0_i32_1 = arith.constant 0 : i32
    return %c0_i32, %c0_i32_0 : i32, i32
  }
  func.func @transform_4(%arg0: i32) -> (i32, i32) {
    %c0_i32 = arith.constant 0 : i32
    %c0_i32_0 = arith.constant 0 : i32
    %c0_i32_1 = arith.constant 0 : i32
    return %c0_i32, %c0_i32_0 : i32, i32
  }
  func.func @transform_5(%arg0: i32) -> (i32, i32) {
    %c0_i32 = arith.constant 0 : i32
    %c0_i32_0 = arith.constant 0 : i32
    return %arg0, %c0_i32 : i32, i32
  }
  func.func @transform_6(%arg0: i32) -> (i32, i32) {
    %c0_i32 = arith.constant 0 : i32
    %c0_i32_0 = arith.constant 0 : i32
    return %arg0, %c0_i32 : i32, i32
  }
}

</mosaic_0001>

<llo_original>
// kernel: policy_forward.1
$region0: #{policy_forward.1}
  #allocation0 [shape = 'u32[]', space=smem, size = 0x4, offset = 0x4, fixed_abs, tag = 'smem constant byte address 0x4 - core index']
  #allocation1 [shape = 'u32[144,128]{1,0:T(1,128)}', space=vmem, size = 0x12000, scoped, tag = 'internal scratch']
  %s0 = inlined_call_operand.hbm [shape: f32[2,32], index: 0, kind: input, shape index: {}]
  %s1 = inlined_call_operand.hbm [shape: bf16[32,256], index: 1, kind: input, shape index: {}]
  %s2 = inlined_call_operand.vmem [shape: f32[1,256], index: 2, kind: input, shape index: {}]
  %s3 = inlined_call_operand.hbm [shape: bf16[256,128], index: 3, kind: input, shape index: {}]
  %s4 = inlined_call_operand.vmem [shape: f32[1,128], index: 4, kind: input, shape index: {}]
  %s5 = inlined_call_operand.hbm [shape: f32[2,8], index: 5, kind: output, shape index: {0}]
  %s6 = inlined_call_operand.vmem [shape: f32[2,1], index: 6, kind: output, shape index: {1}]
  %7 = xla_tuple %s5, %s6
  %s8 = sld [smem:[#allocation0]]
  $region80: #{policy_forward.1} parent=0
    _
  %s10 = ssub.s32 1, %s8
  %s11 = scalar_select 0, %s10, %s8
  $region1: #{policy_forward.1} parent=0
    #allocation2 [shape = 'u8[4096]{0}', space=vmem, size = 0x1000, scoped, tag = 'input window, operand 0, single buffered']
    #allocation3 [shape = 's32[1]{0}', space=sflag, size = 0x4, scoped, tag = 'scoped memory for policy_forward.1']
    #allocation4 [shape = 's32[1]{0}', space=sflag, size = 0x4, scoped, tag = 'scoped memory for policy_forward.1']
    #allocation5 [shape = 'u8[16384]{0}', space=vmem, size = 0x4000, scoped, tag = 'input window, operand 1, single buffered']
    #allocation6 [shape = 's32[1]{0}', space=sflag, size = 0x4, scoped, tag = 'scoped memory for policy_forward.1']
    #allocation7 [shape = 'u8[65536]{0}', space=vmem, size = 0x10000, scoped, tag = 'input window, operand 3, single buffered']
    #allocation8 [shape = 'u8[4096]{0}', space=vmem, size = 0x1000, scoped, tag = 'output window, operand 0, single buffered']
    #allocation9 [shape = 'u8[4096]{0}', space=vmem, size = 0x1000, scoped, tag = 'output window, operand 1, single buffered']
    %12 = vsyncpa [#allocation3], 0
    %13 = vsyncpa [#allocation6], 0
    %14 = vsyncpa [#allocation4], 0
    // Predicated region
    $region2: #{policy_forward.1} parent=1 // pred_check
      _
    $region3: #{policy_forward.1} parent=1 // pred_check_branch
      %16 = sbr.rel (0) target = $region5
    $region4: #{policy_forward.1} parent=1 // pred_region
      %s18 = ssub.s32 128, 32
      %19 = vsyncadd [#allocation3], %s18
      %s20 = sshll.u32 [#allocation2], 4
      %s21 = int_to_ptr.vmem [resolvable:$true] %s20
      %26 = dma.hbm_to_vmem [thread:$0]  %s0, 32, %s21, [#allocation3], 32, 32, 2
    $region5: #{policy_forward.1} parent=1 // pred_fallthru
      _
    // Predicated region
    $region6: #{policy_forward.1} parent=1 // pred_check
      _
    $region7: #{policy_forward.1} parent=1 // pred_check_branch
      %28 = sbr.rel (0) target = $region9
    $region8: #{policy_forward.1} parent=1 // pred_region
      %s30 = ssub.s32 512, 512
      %31 = vsyncadd [#allocation6], %s30
      %s32 = sshll.u32 [#allocation5], 4
      %s33 = int_to_ptr.vmem [resolvable:$true] %s32
      %38 = dma.hbm_to_vmem [thread:$0]  %s1, 512, %s33, [#allocation6], 128, 128, 8
    $region9: #{policy_forward.1} parent=1 // pred_fallthru
      _
    // Predicated region
    $region10: #{policy_forward.1} parent=1 // pred_check
      _
    $region11: #{policy_forward.1} parent=1 // pred_check_branch
      %40 = sbr.rel (0) target = $region13
    $region12: #{policy_forward.1} parent=1 // pred_region
      _
    $region13: #{policy_forward.1} parent=1 // pred_fallthru
      _
    // Predicated region
    $region14: #{policy_forward.1} parent=1 // pred_check
      _
    $region15: #{policy_forward.1} parent=1 // pred_check_branch
      %42 = sbr.rel (0) target = $region17
    $region16: #{policy_forward.1} parent=1 // pred_region
      %s44 = ssub.s32 2048, 2048
      %45 = vsyncadd [#allocation6], %s44
      %s46 = sshll.u32 [#allocation7], 4
      %s47 = int_to_ptr.vmem [resolvable:$true] %s46
      %52 = dma.hbm_to_vmem [thread:$0]  %s3, 2048, %s47, [#allocation6], 64, 64, 4
    $region17: #{policy_forward.1} parent=1 // pred_fallthru
      _
    // Predicated region
    $region18: #{policy_forward.1} parent=1 // pred_check
      _
    $region19: #{policy_forward.1} parent=1 // pred_check_branch
      %54 = sbr.rel (0) target = $region21
    $region20: #{policy_forward.1} parent=1 // pred_region
      _
    $region21: #{policy_forward.1} parent=1 // pred_fallthru
      _
    // Predicated region
    $region22: #{policy_forward.1} parent=1 // pred_check
      _
    $region23: #{policy_forward.1} parent=1 // pred_check_branch
      %56 = sbr.rel (0) target = $region25
    $region24: #{policy_forward.1} parent=1 // pred_region
      %57 = dma.done [#allocation3], 128
    $region25: #{policy_forward.1} parent=1 // pred_fallthru
      _
    // Predicated region
    $region26: #{policy_forward.1} parent=1 // pred_check
      _
    $region27: #{policy_forward.1} parent=1 // pred_check_branch
      %59 = sbr.rel (0) target = $region29
    $region28: #{policy_forward.1} parent=1 // pred_region
      %60 = dma.done [#allocation6], 512
    $region29: #{policy_forward.1} parent=1 // pred_fallthru
      _
    // Predicated region
    $region30: #{policy_forward.1} parent=1 // pred_check
      _
    $region31: #{policy_forward.1} parent=1 // pred_check_branch
      %62 = sbr.rel (0) target = $region33
    $region32: #{policy_forward.1} parent=1 // pred_region
      %63 = dma.done [#allocation6], 2048
    $region33: #{policy_forward.1} parent=1 // pred_fallthru
      _
    %v65 = vld [vmem:[#allocation2] sm:$0xff]
    %v66 = vpack.c.bf16 %v65, %v65
    %v67 = vld [vmem:[#allocation5] sm:$0xff]
    %v68 = vld [vmem:[#allocation5 + $0x8] sm:$0xff]
    %v69 = vld [vmem:[#allocation5 + $0x10] sm:$0xff]
    %v70 = vld [vmem:[#allocation5 + $0x18] sm:$0xff]
    %v71 = vld [vmem:[%s2] sm:$0x3]
    %v73 = vlaneseq
    %v74 = vshrl.u32 %v73, 7
    %v75 = vsub.s32 0, %v74
    %v76 = vrot.slane %v71, %v75
    %v77 = vlaneseq
    %v78 = vshrl.u32 %v77, 7
    %v79 = vsub.s32 1, %v78
    %v80 = vrot.slane %v71, %v79
    %v87 = vunpack.c.l.b16 %v67
    %v88 = vunpack.c.h.b16 %v67
    %v89 = vunpack.c.l.b16 %v68
    %v90 = vunpack.c.h.b16 %v68
    %v91 = vunpack.c.l.b16 %v69
    %v92 = vunpack.c.h.b16 %v69
    %v93 = vunpack.c.l.b16 %v70
    %v94 = vunpack.c.h.b16 %v70
    %v95 = vpack.c.b16 %v89, %v87
    %v96 = vpack.c.b16 %v90, %v88
    %v97 = vpack.c.b16 %v93, %v91
    %v98 = vpack.c.b16 %v94, %v92
    %vm103 = vcmask 261120
    %v105 = vsel %vm103, %v66, 0
    %107 = vmatprep.subr.bf16.mxu0 %v96
    %108 = vmatpush1.bf16.msra.mxu0 %v95
    %109 = vmatprep.subr.bf16.mxu0 %v98
    %110 = vmatpush1.bf16.msra.mxu0 %v97
    %111 = vmatprep.subr.bf16.mxu0 0
    %112 = vmatpush1.bf16.msra.mxu0 0
    %113 = vmatprep.subr.bf16.mxu0 0
    %114 = vmatpush1.bf16.msra.mxu0 0
    %115 = vmatprep.subr.bf16.mxu0 0
    %116 = vmatpush1.bf16.msra.mxu0 0
    %117 = vmatprep.subr.bf16.mxu0 0
    %118 = vmatpush1.bf16.msra.mxu0 0
    %119 = vmatprep.subr.bf16.mxu0 0
    %120 = vmatpush1.bf16.msra.mxu0 0
    %121 = vmatprep.subr.bf16.mxu0 0
    %122 = vmatpush1.bf16.msra.mxu0 0
    %123 = vmatprep.subr.bf16.mxu0 0
    %124 = vmatpush1.bf16.msra.mxu0 0
    %125 = vmatprep.subr.bf16.mxu0 0
    %126 = vmatpush1.bf16.msra.mxu0 0
    %127 = vmatprep.subr.bf16.mxu0 0
    %128 = vmatpush1.bf16.msra.mxu0 0
    %129 = vmatprep.subr.bf16.mxu0 0
    %130 = vmatpush1.bf16.msra.mxu0 0
    %131 = vmatprep.subr.bf16.mxu0 0
    %132 = vmatpush1.bf16.msra.mxu0 0
    %133 = vmatprep.subr.bf16.mxu0 0
    %134 = vmatpush1.bf16.msra.mxu0 0
    %135 = vmatprep.subr.bf16.mxu0 0
    %136 = vmatpush1.bf16.msra.mxu0 0
    %137 = vmatprep.subr.bf16.mxu0 0
    %138 = vmatpush1.bf16.msra.mxu0 0
    %139 = vmatprep.mubr.bf16.mxu0 0
    %140 = vmatmul.mubr.bf16.gmra.mrb[0].mxu0 %v105
    %v141 = vpop.f32.mrb[0].mxu0
    %v142 = vadd.f32 %v76, %v141
    %v143 = vpop.f32.mrb[0].mxu0
    %v144 = vadd.f32 %v80, %v143
    %v145 = vpop.f32.mrb[0].mxu0
    %v146 = vpop.f32.mrb[0].mxu0
    %147 = vdwg.mxu0
    %v148 = vmax.f32 %v142, 0.0
    %v149 = vmax.f32 %v144, 0.0
    %v150 = vpack.c.bf16 %v148, %v148
    %v151 = vpack.c.bf16 %v149, %v149
    %v152 = vld [vmem:[#allocation7] sm:$0xf]
    %v153 = vld [vmem:[#allocation7 + $0x4] sm:$0xf]
    %v154 = vld [vmem:[#allocation7 + $0x8] sm:$0xf]
    %v155 = vld [vmem:[#allocation7 + $0xc] sm:$0xf]
    %v156 = vld [vmem:[#allocation7 + $0x10] sm:$0xf]
    %v157 = vld [vmem:[#allocation7 + $0x14] sm:$0xf]
    %v158 = vld [vmem:[#allocation7 + $0x18] sm:$0xf]
    %v159 = vld [vmem:[#allocation7 + $0x1c] sm:$0xf]
    %v160 = vld [vmem:[#allocation7 + $0x20] sm:$0xf]
    %v161 = vld [vmem:[#allocation7 + $0x24] sm:$0xf]
    %v162 = vld [vmem:[#allocation7 + $0x28] sm:$0xf]
    %v163 = vld [vmem:[#allocation7 + $0x2c] sm:$0xf]
    %v164 = vld [vmem:[#allocation7 + $0x30] sm:$0xf]
    %v165 = vld [vmem:[#allocation7 + $0x34] sm:$0xf]
    %v166 = vld [vmem:[#allocation7 + $0x38] sm:$0xf]
    %v167 = vld [vmem:[#allocation7 + $0x3c] sm:$0xf]
    %v168 = vld [vmem:[#allocation7 + $0x40] sm:$0xf]
    %v169 = vld [vmem:[#allocation7 + $0x44] sm:$0xf]
    %v170 = vld [vmem:[#allocation7 + $0x48] sm:$0xf]
    %v171 = vld [vmem:[#allocation7 + $0x4c] sm:$0xf]
    %v172 = vld [vmem:[#allocation7 + $0x50] sm:$0xf]
    %v173 = vld [vmem:[#allocation7 + $0x54] sm:$0xf]
    %v174 = vld [vmem:[#allocation7 + $0x58] sm:$0xf]
    %v175 = vld [vmem:[#allocation7 + $0x5c] sm:$0xf]
    %v176 = vld [vmem:[#allocation7 + $0x60] sm:$0xf]
    %v177 = vld [vmem:[#allocation7 + $0x64] sm:$0xf]
    %v178 = vld [vmem:[#allocation7 + $0x68] sm:$0xf]
    %v179 = vld [vmem:[#allocation7 + $0x6c] sm:$0xf]
    %v180 = vld [vmem:[#allocation7 + $0x70] sm:$0xf]
    %v181 = vld [vmem:[#allocation7 + $0x74] sm:$0xf]
    %v182 = vld [vmem:[#allocation7 + $0x78] sm:$0xf]
    %v183 = vld [vmem:[#allocation7 + $0x7c] sm:$0xf]
    %v184 = vld [vmem:[%s4] sm:$0x1]
    %v186 = vlaneseq
    %v187 = vshrl.u32 %v186, 7
    %v188 = vsub.s32 0, %v187
    %v189 = vrot.slane %v184, %v188
    %v223 = vunpack.c.l.b16 %v152
    %v224 = vunpack.c.l.b16 %v153
    %v225 = vunpack.c.l.b16 %v154
    %v226 = vunpack.c.l.b16 %v155
    %v227 = vunpack.c.l.b16 %v156
    %v228 = vunpack.c.l.b16 %v157
    %v229 = vunpack.c.l.b16 %v158
    %v230 = vunpack.c.l.b16 %v159
    %v231 = vunpack.c.l.b16 %v160
    %v232 = vunpack.c.l.b16 %v161
    %v233 = vunpack.c.l.b16 %v162
    %v234 = vunpack.c.l.b16 %v163
    %v235 = vunpack.c.l.b16 %v164
    %v236 = vunpack.c.l.b16 %v165
    %v237 = vunpack.c.l.b16 %v166
    %v238 = vunpack.c.l.b16 %v167
    %v239 = vunpack.c.l.b16 %v168
    %v240 = vunpack.c.l.b16 %v169
    %v241 = vunpack.c.l.b16 %v170
    %v242 = vunpack.c.l.b16 %v171
    %v243 = vunpack.c.l.b16 %v172
    %v244 = vunpack.c.l.b16 %v173
    %v245 = vunpack.c.l.b16 %v174
    %v246 = vunpack.c.l.b16 %v175
    %v247 = vunpack.c.l.b16 %v176
    %v248 = vunpack.c.l.b16 %v177
    %v249 = vunpack.c.l.b16 %v178
    %v250 = vunpack.c.l.b16 %v179
    %v251 = vunpack.c.l.b16 %v180
    %v252 = vunpack.c.l.b16 %v181
    %v253 = vunpack.c.l.b16 %v182
    %v254 = vunpack.c.l.b16 %v183
    %v255 = vpack.c.b16 %v224, %v223
    %v256 = vpack.c.b16 %v226, %v225
    %v257 = vpack.c.b16 %v228, %v227
    %v258 = vpack.c.b16 %v230, %v229
    %v259 = vpack.c.b16 %v232, %v231
    %v260 = vpack.c.b16 %v234, %v233
    %v261 = vpack.c.b16 %v236, %v235
    %v262 = vpack.c.b16 %v238, %v237
    %v263 = vpack.c.b16 %v240, %v239
    %v264 = vpack.c.b16 %v242, %v241
    %v265 = vpack.c.b16 %v244, %v243
    %v266 = vpack.c.b16 %v246, %v245
    %v267 = vpack.c.b16 %v248, %v247
    %v268 = vpack.c.b16 %v250, %v249
    %v269 = vpack.c.b16 %v252, %v251
    %v270 = vpack.c.b16 %v254, %v253
    %287 = vmatprep.subr.bf16.mxu0 0
    %288 = vmatpush1.bf16.msra.mxu0 %v255
    %289 = vmatprep.subr.bf16.mxu0 0
    %290 = vmatpush1.bf16.msra.mxu0 %v256
    %291 = vmatprep.subr.bf16.mxu0 0
    %292 = vmatpush1.bf16.msra.mxu0 %v257
    %293 = vmatprep.subr.bf16.mxu0 0
    %294 = vmatpush1.bf16.msra.mxu0 %v258
    %295 = vmatprep.subr.bf16.mxu0 0
    %296 = vmatpush1.bf16.msra.mxu0 %v259
    %297 = vmatprep.subr.bf16.mxu0 0
    %298 = vmatpush1.bf16.msra.mxu0 %v260
    %299 = vmatprep.subr.bf16.mxu0 0
    %300 = vmatpush1.bf16.msra.mxu0 %v261
    %301 = vmatprep.subr.bf16.mxu0 0
    %302 = vmatpush1.bf16.msra.mxu0 %v262
    %303 = vmatprep.subr.bf16.mxu0 0
    %304 = vmatpush1.bf16.msra.mxu0 %v263
    %305 = vmatprep.subr.bf16.mxu0 0
    %306 = vmatpush1.bf16.msra.mxu0 %v264
    %307 = vmatprep.subr.bf16.mxu0 0
    %308 = vmatpush1.bf16.msra.mxu0 %v265
    %309 = vmatprep.subr.bf16.mxu0 0
    %310 = vmatpush1.bf16.msra.mxu0 %v266
    %311 = vmatprep.subr.bf16.mxu0 0
    %312 = vmatpush1.bf16.msra.mxu0 %v267
    %313 = vmatprep.subr.bf16.mxu0 0
    %314 = vmatpush1.bf16.msra.mxu0 %v268
    %315 = vmatprep.subr.bf16.mxu0 0
    %316 = vmatpush1.bf16.msra.mxu0 %v269
    %317 = vmatprep.subr.bf16.mxu0 0
    %318 = vmatpush1.bf16.msra.mxu0 %v270
    %319 = vmatprep.mubr.bf16.mxu0 %v151
    %320 = vmatmul.mubr.bf16.gmra.mrb[0].mxu0 %v150
    %v321 = vpop.f32.mrb[0].mxu0
    %v322 = vadd.f32 %v189, %v321
    %v323 = vpop.f32.mrb[0].mxu0
    %v324 = vpop.f32.mrb[0].mxu0
    %v325 = vpop.f32.mrb[0].mxu0
    %326 = vdwg.mxu0
    %v327 = vlaneseq
    %v328 = vand.u32 %v327, 127
    %vm329 = vcmp.lt.s32.totalorder %v328, 8
    %vm330 = vcmp.eq.s32.totalorder %v328, 8
    %v331 = vsel %vm329, %v322, -1e+30
    %332 = vmax.xlane.f32.xlu0 %v331
    %v333 = vpop.xlane.xlu0 %332
    %v334 = vsub.f32 %v331, %v333
    %v335 = vmul.f32 %v334, 1.442695
    %v336 = vpow.pop %v335
    %337 = vadd.xlane.f32.xlu0 %v336
    %v338 = vpop.xlane.xlu0 %337
    %v339 = vrcp.pop %v338
    %v340 = vmul.f32 %v338, %v339
    %v341 = vsub.f32 2.0, %v340
    %v342 = vmul.f32 %v339, %v341
    %v343 = vmul.f32 %v336, %v342
    %vm344 = vcmask 64512
    %345 = vst.msk [vmem:[#allocation8] sm:$0xff] %vm344, %v343
    %v346 = vsel %vm330, %v322, 0.0
    %347 = vadd.xlane.f32.xlu0 %v346
    %v348 = vpop.xlane.xlu0 %347
    %vm349 = vcmask 7168
    %350 = vst.msk [vmem:[#allocation9] sm:$0xff] %vm349, %v348
    // Predicated region
    $region34: #{policy_forward.1} parent=1 // pred_check
      _
    $region35: #{policy_forward.1} parent=1 // pred_check_branch
      %352 = sbr.rel (0) target = $region37
    $region36: #{policy_forward.1} parent=1 // pred_region
      %s354 = ssub.s32 128, 32
      %355 = vsyncadd [#allocation4], %s354
      %s356 = sshll.u32 [#allocation8], 4
      %s357 = int_to_ptr.vmem [resolvable:$true] %s356
      %362 = dma.vmem_to_hbm [thread:$0]  %s357, 32, %s5, [#allocation4], 32, 32, 2
    $region37: #{policy_forward.1} parent=1 // pred_fallthru
      _
    // Predicated region
    $region38: #{policy_forward.1} parent=1 // pred_check
      _
    $region39: #{policy_forward.1} parent=1 // pred_check_branch
      %364 = sbr.rel (0) target = $region41
    $region40: #{policy_forward.1} parent=1 // pred_region
      // Predicated region
      $region42: #{policy_forward.1} parent=40 // pred_check
        _
      $region43: #{policy_forward.1} parent=40 // pred_check_branch
        %366 = sbr.rel (0) target = $region45
      $region44: #{policy_forward.1} parent=40 // pred_region
        // Predicated region
        $region46: #{policy_forward.1} parent=44 // pred_check
          _
        $region47: #{policy_forward.1} parent=44 // pred_check_branch
          %368 = sbr.rel target = $region49
        $region48: #{policy_forward.1} parent=44 // pred_region
          // Predicated region
          $region61: #{policy_forward.1} parent=48 // pred_check
            _
          $region62: #{policy_forward.1} parent=48 // pred_check_branch
            %383 = sbr.rel (0) target = $region64
          $region63: #{policy_forward.1} parent=48 // pred_region
            loop: start=0, step=1, limit=1
            $region65: #{policy_forward.1} parent=63 // loop_pre_header
              _
            $region66: #{policy_forward.1} parent=63 // loop_header
              %s386 = sphi 0, %s390
              %p387 = scmp.ge.s32.totalorder %s386, 1
              %s391 = sphi [#allocation9], [#allocation9]
              %s392 = sphi %s6, %s6
            $region67: #{policy_forward.1} parent=63 // loop_header_branch
              %389 = sbr.rel (%p387) target = $region71
            $region68: #{policy_forward.1} parent=63 // loop_body
              %v393 = vld [vmem:[%s391] sm:$0x3]
              %394 = vst [vmem:[%s392] sm:$0x3] %v393
            $region69: #{policy_forward.1} parent=63 // loop_footer
              %s390 = sadd.s32 1, %s386
            $region70: #{policy_forward.1} parent=63 // loop_footer_branch
              %385 = sbr.rel target = $region66
            $region71: #{policy_forward.1} parent=63 // loop_exit
              _
          $region64: #{policy_forward.1} parent=48 // pred_fallthru
            _
        $region49: #{policy_forward.1} parent=44 // pred_fallthru
          _
        // Predicated region
        $region50: #{policy_forward.1} parent=44 // pred_check
          _
        $region51: #{policy_forward.1} parent=44 // pred_check_branch
          %370 = sbr.rel (0) target = $region53
        $region52: #{policy_forward.1} parent=44 // pred_region
          loop: start=0, step=1, limit=1
          $region54: #{policy_forward.1} parent=52 // loop_pre_header
            _
          $region55: #{policy_forward.1} parent=52 // loop_header
            %s373 = sphi 0, %s377
            %p374 = scmp.ge.s32.totalorder %s373, 1
            %s378 = sphi [#allocation9], [#allocation9]
            %s379 = sphi %s6, %s6
          $region56: #{policy_forward.1} parent=52 // loop_header_branch
            %376 = sbr.rel (%p374) target = $region60
          $region57: #{policy_forward.1} parent=52 // loop_body
            %v380 = vld [vmem:[%s378] sm:$0x3]
            %381 = vst [vmem:[%s379] sm:$0x3] %v380
          $region58: #{policy_forward.1} parent=52 // loop_footer
            %s377 = sadd.s32 1, %s373
          $region59: #{policy_forward.1} parent=52 // loop_footer_branch
            %372 = sbr.rel target = $region55
          $region60: #{policy_forward.1} parent=52 // loop_exit
            _
        $region53: #{policy_forward.1} parent=44 // pred_fallthru
          _
      $region45: #{policy_forward.1} parent=40 // pred_fallthru
        _
      %395 = vnop
    $region41: #{policy_forward.1} parent=1 // pred_fallthru
      _
    // Predicated region
    $region72: #{policy_forward.1} parent=1 // pred_check
      _
    $region73: #{policy_forward.1} parent=1 // pred_check_branch
      %397 = sbr.rel (0) target = $region75
    $region74: #{policy_forward.1} parent=1 // pred_region
      %398 = dma.done [#allocation4], 128
    $region75: #{policy_forward.1} parent=1 // pred_fallthru
      _
    // Predicated region
    $region76: #{policy_forward.1} parent=1 // pred_check
      _
    $region77: #{policy_forward.1} parent=1 // pred_check_branch
      %400 = sbr.rel (0) target = $region79
    $region78: #{policy_forward.1} parent=1 // pred_region
      _
    $region79: #{policy_forward.1} parent=1 // pred_fallthru
      _
    %401 = vsyncpa [#allocation3], 1
    %402 = vsyncpa [#allocation6], 1
    %403 = vsyncpa [#allocation4], 1

</llo_original>
